<compile_context>
chip_gen: v5e
topology: v5e:2x2
jax: 0.10.0
libtpu: 0.0.40
codegen_flags: <defaults>
</compile_context>

<pallas_src>
import jax
import jax.numpy as jnp
from jax.experimental import pallas as pl
from jax.experimental.pallas import tpu as pltpu

IN_DIM = 64 * 3   # 192
H1 = 64
H2 = 32
SCALES = 3
NEG_SLOPE = 0.2
BN_EPS = 1e-5


def _leaky_relu(v):
    return jnp.where(v >= 0, v, NEG_SLOPE * v)


def experts_kernel(x_ref, w1_ref, b1_ref, w2_ref, b2_ref, w3_ref, o_ref):
    # x_ref: (192, tn)  -- channels on sublanes, points on lanes.
    x = x_ref[...]

    # fc_layer1: conv1x1 (+ folded BN) + LeakyReLU   -> (64, tn)
    h1 = jnp.dot(w1_ref[...], x, preferred_element_type=jnp.float32) + b1_ref[...]
    h1 = _leaky_relu(h1)

    # fc_layer2: conv1x1 (+ folded BN) + LeakyReLU   -> (32, tn)
    h2 = jnp.dot(w2_ref[...], h1, preferred_element_type=jnp.float32) + b2_ref[...]
    h2 = _leaky_relu(h2)

    # fc_layer3: conv1x1, no bias                    -> (3, tn)
    h3 = jnp.dot(w3_ref[...], h2, preferred_element_type=jnp.float32)

    # softmax over the 3 channels: explicit row ops (no XLU axis reduce).
    r0 = h3[0:1, :]
    r1 = h3[1:2, :]
    r2 = h3[2:3, :]
    m = jnp.maximum(jnp.maximum(r0, r1), r2)
    e0 = jnp.exp(r0 - m)
    e1 = jnp.exp(r1 - m)
    e2 = jnp.exp(r2 - m)
    inv = pl.reciprocal(e0 + e1 + e2, approx=False)
    o_ref[...] = jnp.concatenate([e0 * inv, e1 * inv, e2 * inv], axis=0)


def experts_net_pallas(x, params, *, tn=1024):
    """x: (B, 192, N) float32 -> (B, 3, N) float32."""
    B, C, N = x.shape
    assert C == IN_DIM
    w1, b1, w2, b2, w3 = params

    # Point tile: multiple of 128 lanes, no bigger than the (padded) point
    # count so small inputs do not over-pad.  192*tn*4B (~0.75 MiB at tn=1024,
    # ~1.5 MiB double-buffered) fits comfortably in VMEM on v5e/v6e/v7x.
    tn = max(128, min(tn, pl.cdiv(N, 128) * 128))
    n_pad = pl.cdiv(N, tn) * tn
    if n_pad != N:
        x = jnp.pad(x, ((0, 0), (0, 0), (0, n_pad - N)))

    grid = (B, n_pad // tn)
    weights_full = lambda b, n: (0, 0)

    cost = pl.CostEstimate(
        flops=2 * B * n_pad * (IN_DIM * H1 + H1 * H2 + H2 * SCALES),
        transcendentals=B * n_pad * SCALES,
        bytes_accessed=B * n_pad * (IN_DIM + SCALES) * 4,
    )

    out = pl.pallas_call(
        experts_kernel,
        out_shape=jax.ShapeDtypeStruct((B, SCALES, n_pad), jnp.float32),
        grid_spec=pltpu.PrefetchScalarGridSpec(
            num_scalar_prefetch=0,
            grid=grid,
            in_specs=[
                pl.BlockSpec((None, IN_DIM, tn), lambda b, n: (b, 0, n)),
                pl.BlockSpec((H1, IN_DIM), weights_full),
                pl.BlockSpec((H1, 1), weights_full),
                pl.BlockSpec((H2, H1), weights_full),
                pl.BlockSpec((H2, 1), weights_full),
                pl.BlockSpec((SCALES, H2), weights_full),
            ],
            out_specs=pl.BlockSpec((None, SCALES, tn), lambda b, n: (b, 0, n)),
        ),
        compiler_params=pltpu.CompilerParams(
            dimension_semantics=("parallel", "parallel")),
        cost_estimate=cost,
    )(x, w1, b1, w2, b2, w3)

    if n_pad != N:
        out = out[:, :, :N]
    return out


def init_params(key):
    """Deterministic parameter init matching the module's shapes.

    Conv1d(k=1) weight (out, in, 1) is stored as (out, in).  Eval-mode
    BatchNorm1d is folded into the preceding conv (weight/bias).
    """
    ks = jax.random.split(key, 10)

    def conv_init(k, fan_in, fan_out, bias):
        bound = 1.0 / jnp.sqrt(fan_in)
        w = jax.random.uniform(k, (fan_out, fan_in), jnp.float32, -bound, bound)
        b = (jax.random.uniform(jax.random.fold_in(k, 1), (fan_out, 1),
                                jnp.float32, -bound, bound)
             if bias else jnp.zeros((fan_out, 1), jnp.float32))
        return w, b

    w1, b1 = conv_init(ks[0], IN_DIM, H1, bias=True)
    w2, b2 = conv_init(ks[1], H1, H2, bias=True)
    w3, _ = conv_init(ks[2], H2, SCALES, bias=False)

    def bn_params(kg, kb, km, kv, c):
        gamma = 1.0 + 0.1 * jax.random.normal(kg, (c,), jnp.float32)
        beta = 0.1 * jax.random.normal(kb, (c,), jnp.float32)
        mean = 0.1 * jax.random.normal(km, (c,), jnp.float32)
        var = jnp.abs(1.0 + 0.1 * jax.random.normal(kv, (c,), jnp.float32))
        return gamma, beta, mean, var

    # fold eval-mode BN: y = s*(Wx + b) + t,  s = g/sqrt(var+eps), t = beta - s*mean
    g1, be1, m1, v1 = bn_params(ks[3], ks[4], ks[5], ks[6], H1)
    s1 = g1 / jnp.sqrt(v1 + BN_EPS)
    w1f = w1 * s1[:, None]
    b1f = b1 * s1[:, None] + (be1 - s1 * m1)[:, None]

    g2, be2, m2, v2 = bn_params(ks[7], ks[8], ks[9], jax.random.fold_in(ks[9], 7), H2)
    s2 = g2 / jnp.sqrt(v2 + BN_EPS)
    w2f = w2 * s2[:, None]
    b2f = b2 * s2[:, None] + (be2 - s2 * m2)[:, None]

    return (w1f, b1f, w2f, b2f, w3)


def experts_net_ref(x, params):
    """Pure-JAX reference (same folded-BN eval semantics), NCW throughout."""
    w1, b1, w2, b2, w3 = params
    h = jnp.einsum('oc,bcn->bon', w1, x) + b1[None, :, :]
    h = _leaky_relu(h)
    h = jnp.einsum('oc,bcn->bon', w2, h) + b2[None, :, :]
    h = _leaky_relu(h)
    h = jnp.einsum('oc,bcn->bon', w3, h)
    return jax.nn.softmax(h, axis=1)


if __name__ == "__main__":
    key = jax.random.PRNGKey(0)
    kx, kp = jax.random.split(key)

    B, N = 2, 200   # N not a multiple of 128 -> exercises the padded last tile
    x = jax.random.normal(kx, (B, IN_DIM, N), jnp.float32)
    params = init_params(kp)

    out = experts_net_pallas(x, params)
    out = jax.block_until_ready(out)

    ref = experts_net_ref(x, params)
    assert out.shape == (B, SCALES, N)
    assert jnp.allclose(out, ref, atol=1e-5, rtol=1e-5), "mismatch vs reference"
    # softmax sanity: channel probabilities sum to 1
    assert jnp.allclose(jnp.sum(out, axis=1), 1.0, atol=1e-5)

    print("KERNEL_OK")
</pallas_src>

<mosaic_0001>
module attributes {stable_mosaic.version = 11 : i64} {
  func.func @experts_kernel(%arg0: i32, %arg1: i32, %arg2: memref<1x192x256xf32, #tpu.memory_space<vmem>>, %arg3: memref<64x192xf32, #tpu.memory_space<vmem>>, %arg4: memref<64x1xf32, #tpu.memory_space<vmem>>, %arg5: memref<32x64xf32, #tpu.memory_space<vmem>>, %arg6: memref<32x1xf32, #tpu.memory_space<vmem>>, %arg7: memref<3x32xf32, #tpu.memory_space<vmem>>, %arg8: memref<1x3x256xf32, #tpu.memory_space<vmem>>) attributes {dimension_semantics = [#tpu.dimension_semantics<parallel>, #tpu.dimension_semantics<parallel>], iteration_bounds = array<i64: 2, 1>, scalar_prefetch = 0 : i64, scratch_operands = 0 : i64, tpu.core_type = #tpu.core_type<tc>, window_params = [{transform_indices = @transform_0, window_bounds = array<i64: 1, 192, 256>}, {pipeline_mode = #tpu.pipeline_mode<synchronous>, transform_indices = @transform_1, window_bounds = array<i64: 64, 192>}, {pipeline_mode = #tpu.pipeline_mode<synchronous>, transform_indices = @transform_2, window_bounds = array<i64: 64, 1>}, {pipeline_mode = #tpu.pipeline_mode<synchronous>, transform_indices = @transform_3, window_bounds = array<i64: 32, 64>}, {pipeline_mode = #tpu.pipeline_mode<synchronous>, transform_indices = @transform_4, window_bounds = array<i64: 32, 1>}, {pipeline_mode = #tpu.pipeline_mode<synchronous>, transform_indices = @transform_5, window_bounds = array<i64: 3, 32>}, {transform_indices = @transform_6, window_bounds = array<i64: 1, 3, 256>}]} {
    %c0 = arith.constant 0 : index
    %c0_0 = arith.constant 0 : index
    %c0_1 = arith.constant 0 : index
    %0 = vector.load %arg2[%c0, %c0_0, %c0_1] : memref<1x192x256xf32, #tpu.memory_space<vmem>>, vector<1x192x256xf32>
    %1 = vector.shape_cast %0 : vector<1x192x256xf32> to vector<192x256xf32>
    %c0_2 = arith.constant 0 : index
    %c0_3 = arith.constant 0 : index
    %2 = vector.load %arg3[%c0_2, %c0_3] : memref<64x192xf32, #tpu.memory_space<vmem>>, vector<64x192xf32>
    %cst = arith.constant dense<0.000000e+00> : vector<64x256xf32>
    %3 = tpu.matmul %2, %1, %cst {dimension_numbers = #tpu.dot_dimension_numbers<[1], [0], [0], [1], [0, 0, 1, 1], [], []>} : vector<64x192xf32>, vector<192x256xf32>, vector<64x256xf32> -> vector<64x256xf32>
    %c0_4 = arith.constant 0 : index
    %c0_5 = arith.constant 0 : index
    %4 = vector.load %arg4[%c0_4, %c0_5] : memref<64x1xf32, #tpu.memory_space<vmem>>, vector<64x1xf32>
    %5 = vector.broadcast %4 : vector<64x1xf32> to vector<64x256xf32>
    %6 = arith.addf %3, %5 : vector<64x256xf32>
    %cst_6 = arith.constant 0.000000e+00 : f32
    %7 = vector.broadcast %cst_6 : f32 to vector<64x256xf32>
    %8 = arith.cmpf oge, %6, %7 : vector<64x256xf32>
    %cst_7 = arith.constant 2.000000e-01 : f32
    %9 = vector.broadcast %cst_7 : f32 to vector<64x256xf32>
    %10 = arith.mulf %9, %6 : vector<64x256xf32>
    %11 = arith.select %8, %6, %10 : vector<64x256xi1>, vector<64x256xf32>
    %c0_8 = arith.constant 0 : index
    %c0_9 = arith.constant 0 : index
    %12 = vector.load %arg5[%c0_8, %c0_9] : memref<32x64xf32, #tpu.memory_space<vmem>>, vector<32x64xf32>
    %cst_10 = arith.constant dense<0.000000e+00> : vector<32x256xf32>
    %13 = tpu.matmul %12, %11, %cst_10 {dimension_numbers = #tpu.dot_dimension_numbers<[1], [0], [0], [1], [0, 0, 1, 1], [], []>} : vector<32x64xf32>, vector<64x256xf32>, vector<32x256xf32> -> vector<32x256xf32>
    %c0_11 = arith.constant 0 : index
    %c0_12 = arith.constant 0 : index
    %14 = vector.load %arg6[%c0_11, %c0_12] : memref<32x1xf32, #tpu.memory_space<vmem>>, vector<32x1xf32>
    %15 = vector.broadcast %14 : vector<32x1xf32> to vector<32x256xf32>
    %16 = arith.addf %13, %15 : vector<32x256xf32>
    %cst_13 = arith.constant 0.000000e+00 : f32
    %17 = vector.broadcast %cst_13 : f32 to vector<32x256xf32>
    %18 = arith.cmpf oge, %16, %17 : vector<32x256xf32>
    %cst_14 = arith.constant 2.000000e-01 : f32
    %19 = vector.broadcast %cst_14 : f32 to vector<32x256xf32>
    %20 = arith.mulf %19, %16 : vector<32x256xf32>
    %21 = arith.select %18, %16, %20 : vector<32x256xi1>, vector<32x256xf32>
    %c0_15 = arith.constant 0 : index
    %c0_16 = arith.constant 0 : index
    %22 = vector.load %arg7[%c0_15, %c0_16] : memref<3x32xf32, #tpu.memory_space<vmem>>, vector<3x32xf32>
    %cst_17 = arith.constant dense<0.000000e+00> : vector<3x256xf32>
    %23 = tpu.matmul %22, %21, %cst_17 {dimension_numbers = #tpu.dot_dimension_numbers<[1], [0], [0], [1], [0, 0, 1, 1], [], []>} : vector<3x32xf32>, vector<32x256xf32>, vector<3x256xf32> -> vector<3x256xf32>
    %24 = vector.extract_strided_slice %23 {offsets = [0, 0], sizes = [1, 256], strides = [1, 1]} : vector<3x256xf32> to vector<1x256xf32>
    %25 = vector.extract_strided_slice %23 {offsets = [1, 0], sizes = [1, 256], strides = [1, 1]} : vector<3x256xf32> to vector<1x256xf32>
    %26 = vector.extract_strided_slice %23 {offsets = [2, 0], sizes = [1, 256], strides = [1, 1]} : vector<3x256xf32> to vector<1x256xf32>
    %27 = arith.maximumf %24, %25 : vector<1x256xf32>
    %28 = arith.maximumf %27, %26 : vector<1x256xf32>
    %29 = arith.subf %24, %28 : vector<1x256xf32>
    %30 = math.exp %29 : vector<1x256xf32>
    %31 = arith.subf %25, %28 : vector<1x256xf32>
    %32 = math.exp %31 : vector<1x256xf32>
    %33 = arith.subf %26, %28 : vector<1x256xf32>
    %34 = math.exp %33 : vector<1x256xf32>
    %35 = arith.addf %30, %32 : vector<1x256xf32>
    %36 = arith.addf %35, %34 : vector<1x256xf32>
    %37 = tpu.reciprocal %36 : vector<1x256xf32> -> vector<1x256xf32>
    %38 = arith.mulf %30, %37 : vector<1x256xf32>
    %39 = arith.mulf %32, %37 : vector<1x256xf32>
    %40 = arith.mulf %34, %37 : vector<1x256xf32>
    %41 = tpu.concatenate %38, %39, %40 in 0 : vector<1x256xf32>, vector<1x256xf32>, vector<1x256xf32> -> vector<3x256xf32>
    %c0_18 = arith.constant 0 : index
    %c0_19 = arith.constant 0 : index
    %c0_20 = arith.constant 0 : index
    %42 = vector.load %arg8[%c0_18, %c0_19, %c0_20] : memref<1x3x256xf32, #tpu.memory_space<vmem>>, vector<1x3x256xf32>
    %43 = vector.shape_cast %42 : vector<1x3x256xf32> to vector<3x256xf32>
    %44 = vector.shape_cast %41 : vector<3x256xf32> to vector<1x3x256xf32>
    tpu.vector_store %arg8[%c0_18, %c0_19, %c0_20], %44 {strides = array<i32>} : memref<1x3x256xf32, #tpu.memory_space<vmem>>, vector<1x3x256xf32>,
    return
  }
  func.func @transform_0(%arg0: i32, %arg1: i32) -> (i32, i32, i32) {
    %c0_i32 = arith.constant 0 : i32
    %c0_i32_0 = arith.constant 0 : i32
    return %arg0, %c0_i32, %arg1 : i32, i32, i32
  }
  func.func @transform_1(%arg0: i32, %arg1: i32) -> (i32, i32) {
    %c0_i32 = arith.constant 0 : i32
    %c0_i32_0 = arith.constant 0 : i32
    %c0_i32_1 = arith.constant 0 : i32
    return %c0_i32, %c0_i32_0 : i32, i32
  }
  func.func @transform_2(%arg0: i32, %arg1: i32) -> (i32, i32) {
    %c0_i32 = arith.constant 0 : i32
    %c0_i32_0 = arith.constant 0 : i32
    %c0_i32_1 = arith.constant 0 : i32
    return %c0_i32, %c0_i32_0 : i32, i32
  }
  func.func @transform_3(%arg0: i32, %arg1: i32) -> (i32, i32) {
    %c0_i32 = arith.constant 0 : i32
    %c0_i32_0 = arith.constant 0 : i32
    %c0_i32_1 = arith.constant 0 : i32
    return %c0_i32, %c0_i32_0 : i32, i32
  }
  func.func @transform_4(%arg0: i32, %arg1: i32) -> (i32, i32) {
    %c0_i32 = arith.constant 0 : i32
    %c0_i32_0 = arith.constant 0 : i32
    %c0_i32_1 = arith.constant 0 : i32
    return %c0_i32, %c0_i32_0 : i32, i32
  }
  func.func @transform_5(%arg0: i32, %arg1: i32) -> (i32, i32) {
    %c0_i32 = arith.constant 0 : i32
    %c0_i32_0 = arith.constant 0 : i32
    %c0_i32_1 = arith.constant 0 : i32
    return %c0_i32, %c0_i32_0 : i32, i32
  }
  func.func @transform_6(%arg0: i32, %arg1: i32) -> (i32, i32, i32) {
    %c0_i32 = arith.constant 0 : i32
    %c0_i32_0 = arith.constant 0 : i32
    return %arg0, %c0_i32, %arg1 : i32, i32, i32
  }
}

</mosaic_0001>

<llo_original>
// kernel: tpu_custom_call.1
$region0: #{tpu_custom_call.1}
  #allocation0 [shape = 'u32[]', space=smem, size = 0x4, offset = 0x4, fixed_abs, tag = 'smem constant byte address 0x4 - core index']
  #allocation1 [shape = 'u32[72,128]{1,0:T(1,128)}', space=vmem, size = 0x9000, scoped, tag = 'internal scratch']
  %s0 = inlined_call_operand.hbm [shape: f32[2,192,256], index: 0, kind: input, shape index: {}]
  %s1 = inlined_call_operand.hbm [shape: f32[64,192], index: 1, kind: input, shape index: {}]
  %s2 = inlined_call_operand.vmem [shape: f32[64,1], index: 2, kind: input, shape index: {}]
  %s3 = inlined_call_operand.vmem [shape: f32[32,64], index: 3, kind: input, shape index: {}]
  %s4 = inlined_call_operand.vmem [shape: f32[32,1], index: 4, kind: input, shape index: {}]
  %s5 = inlined_call_operand.vmem [shape: f32[3,32], index: 5, kind: input, shape index: {}]
  %s6 = inlined_call_operand.vmem [shape: f32[2,3,256], index: 6, kind: output, shape index: {}]
  %s7 = sld [smem:[#allocation0]]
  $region65: #{tpu_custom_call.1} parent=0
    _
  %s9 = ssub.s32 1, %s7
  %s10 = scalar_select 0, %s9, %s7
  $region1: #{tpu_custom_call.1} parent=0
    #allocation2 [shape = 'u8[393216]{0}', space=vmem, size = 0x60000, scoped, tag = 'input window, operand 0']
    #allocation3 [shape = 's32[2]{0}', space=sflag, size = 0x8, scoped, tag = 'scoped memory for tpu_custom_call.1']
    #allocation4 [shape = 'u8[65536]{0}', space=vmem, size = 0x10000, scoped, tag = 'input window, operand 1, single buffered']
    #allocation5 [shape = 's32[1]{0}', space=sflag, size = 0x4, scoped, tag = 'scoped memory for tpu_custom_call.1']
    %11 = vsyncpa [#allocation3], 0
    %s12 = scalar_lea.sflag [#allocation3], 1
    %13 = vsyncpa %s12, 0
    %14 = vsyncpa [#allocation5], 0
    loop: start=0, step=1, limit=4
    $region2: #{tpu_custom_call.1} parent=1 // loop_pre_header
      _
    $region3: #{tpu_custom_call.1} parent=1 // loop_header
      %s16 = sphi 0, %s20
      %p17 = scmp.ge.s32.totalorder %s16, 4
      %s23 = sphi 0, %s35
      %s24 = sphi 0, %s31
      %s25 = sphi 0, %s23
      %s26 = sphi 0, %s24
      %s27 = sphi 0, %s25
      %s28 = sphi 0, %s26
      %s40 = sphi 0, %s42
      %s43 = sphi 0, %s40
      %s44 = sphi 0, %s43
      %s60 = sphi 0, %s44
      %s64 = sphi 0, %s64
      %s66 = sphi 0, %s64
      %s67 = sphi 0, %s66
      %s81 = sphi 0, %s67
      %s85 = sphi 0, %s85
      %s87 = sphi 0, %s85
      %s88 = sphi 0, %s87
      %s102 = sphi 0, %s88
      %s106 = sphi 0, %s106
      %s108 = sphi 0, %s106
      %s109 = sphi 0, %s108
      %s123 = sphi 0, %s109
      %s127 = sphi 0, %s127
      %s129 = sphi 0, %s127
      %s130 = sphi 0, %s129
      %s144 = sphi 0, %s130
      %s148 = sphi 0, %s148
      %s150 = sphi 0, %s148
      %s151 = sphi 0, %s150
      %s165 = sphi 0, %s151
      %s173 = sphi 0, %s175
      %s176 = sphi 0, %s173
      %s177 = sphi 0, %s176
      %s193 = sphi 0, %s177
    $region4: #{tpu_custom_call.1} parent=1 // loop_header_branch
      %19 = sbr.rel (%p17) target = $region8
    $region5: #{tpu_custom_call.1} parent=1 // loop_body
      %s21 = ssub.s32 %s16, 1
      %s22 = ssub.s32 %s16, 2
      %s29 = sadd.s32 1, %s24
      %p30 = scmp.ge.s32.totalorder %s29, 1
      %s31 = scalar_select %p30, 0, %s29
      %s32 = sadd.s32 1, %s23
      %s33 = scalar_select %p30, %s32, %s23
      %p34 = scmp.ge.s32.totalorder %s33, 2
      %s35 = scalar_select %p34, 0, %s33
      %s36 = ssub.s32 %s23, %s35
      %s37 = ssub.s32 %s24, %s31
      %s38 = sor.u32 %s36, %s37
      %p39 = scmp.eq.s32.totalorder %s38, 0
      %s41 = sadd.s32 %s40, 1
      %s42 = scalar_select %p39, %s40, %s41
      %p45 = pneg %p39
      %p46 = scmp.eq.s32.totalorder %s16, 1
      %p47 = por %p45, %p46
      %p48 = scmp.ne.s32.totalorder %s40, %s43
      %p49 = scmp.eq.s32.totalorder %s16, 0
      %p50 = por %p48, %p49
      %p51 = scmp.ne.s32.totalorder %s40, %s43
      %p52 = scmp.eq.s32.totalorder %s21, 1
      %p53 = por %p51, %p52
      %p54 = scmp.ne.s32.totalorder %s43, %s44
      %p55 = scmp.eq.s32.totalorder %s21, 0
      %p56 = por %p54, %p55
      %p57 = scmp.ne.s32.totalorder %s43, %s44
      %p58 = scmp.eq.s32.totalorder %s22, 1
      %p59 = por %p57, %p58
      %p61 = scmp.ne.s32.totalorder %s44, %s60
      %p62 = scmp.eq.s32.totalorder %s22, 0
      %p63 = por %p61, %p62
      %s65 = sadd.s32 %s64, 1
      %p68 = scmp.eq.s32.totalorder %s16, 1
      %p69 = scmp.ne.s32.totalorder %s64, %s66
      %p70 = scmp.eq.s32.totalorder %s16, 0
      %p71 = por %p69, %p70
      %p72 = scmp.ne.s32.totalorder %s64, %s66
      %p73 = scmp.eq.s32.totalorder %s21, 1
      %p74 = por %p72, %p73
      %p75 = scmp.ne.s32.totalorder %s66, %s67
      %p76 = scmp.eq.s32.totalorder %s21, 0
      %p77 = por %p75, %p76
      %p78 = scmp.ne.s32.totalorder %s66, %s67
      %p79 = scmp.eq.s32.totalorder %s22, 1
      %p80 = por %p78, %p79
      %p82 = scmp.ne.s32.totalorder %s67, %s81
      %p83 = scmp.eq.s32.totalorder %s22, 0
      %p84 = por %p82, %p83
      %s86 = sadd.s32 %s85, 1
      %p89 = scmp.eq.s32.totalorder %s16, 1
      %p90 = scmp.ne.s32.totalorder %s85, %s87
      %p91 = scmp.eq.s32.totalorder %s16, 0
      %p92 = por %p90, %p91
      %p93 = scmp.ne.s32.totalorder %s85, %s87
      %p94 = scmp.eq.s32.totalorder %s21, 1
      %p95 = por %p93, %p94
      %p96 = scmp.ne.s32.totalorder %s87, %s88
      %p97 = scmp.eq.s32.totalorder %s21, 0
      %p98 = por %p96, %p97
      %p99 = scmp.ne.s32.totalorder %s87, %s88
      %p100 = scmp.eq.s32.totalorder %s22, 1
      %p101 = por %p99, %p100
      %p103 = scmp.ne.s32.totalorder %s88, %s102
      %p104 = scmp.eq.s32.totalorder %s22, 0
      %p105 = por %p103, %p104
      %s107 = sadd.s32 %s106, 1
      %p110 = scmp.eq.s32.totalorder %s16, 1
      %p111 = scmp.ne.s32.totalorder %s106, %s108
      %p112 = scmp.eq.s32.totalorder %s16, 0
      %p113 = por %p111, %p112
      %p114 = scmp.ne.s32.totalorder %s106, %s108
      %p115 = scmp.eq.s32.totalorder %s21, 1
      %p116 = por %p114, %p115
      %p117 = scmp.ne.s32.totalorder %s108, %s109
      %p118 = scmp.eq.s32.totalorder %s21, 0
      %p119 = por %p117, %p118
      %p120 = scmp.ne.s32.totalorder %s108, %s109
      %p121 = scmp.eq.s32.totalorder %s22, 1
      %p122 = por %p120, %p121
      %p124 = scmp.ne.s32.totalorder %s109, %s123
      %p125 = scmp.eq.s32.totalorder %s22, 0
      %p126 = por %p124, %p125
      %s128 = sadd.s32 %s127, 1
      %p131 = scmp.eq.s32.totalorder %s16, 1
      %p132 = scmp.ne.s32.totalorder %s127, %s129
      %p133 = scmp.eq.s32.totalorder %s16, 0
      %p134 = por %p132, %p133
      %p135 = scmp.ne.s32.totalorder %s127, %s129
      %p136 = scmp.eq.s32.totalorder %s21, 1
      %p137 = por %p135, %p136
      %p138 = scmp.ne.s32.totalorder %s129, %s130
      %p139 = scmp.eq.s32.totalorder %s21, 0
      %p140 = por %p138, %p139
      %p141 = scmp.ne.s32.totalorder %s129, %s130
      %p142 = scmp.eq.s32.totalorder %s22, 1
      %p143 = por %p141, %p142
      %p145 = scmp.ne.s32.totalorder %s130, %s144
      %p146 = scmp.eq.s32.totalorder %s22, 0
      %p147 = por %p145, %p146
      %s149 = sadd.s32 %s148, 1
      %p152 = scmp.eq.s32.totalorder %s16, 1
      %p153 = scmp.ne.s32.totalorder %s148, %s150
      %p154 = scmp.eq.s32.totalorder %s16, 0
      %p155 = por %p153, %p154
      %p156 = scmp.ne.s32.totalorder %s148, %s150
      %p157 = scmp.eq.s32.totalorder %s21, 1
      %p158 = por %p156, %p157
      %p159 = scmp.ne.s32.totalorder %s150, %s151
      %p160 = scmp.eq.s32.totalorder %s21, 0
      %p161 = por %p159, %p160
      %p162 = scmp.ne.s32.totalorder %s150, %s151
      %p163 = scmp.eq.s32.totalorder %s22, 1
      %p164 = por %p162, %p163
      %p166 = scmp.ne.s32.totalorder %s151, %s165
      %p167 = scmp.eq.s32.totalorder %s22, 0
      %p168 = por %p166, %p167
      %s169 = ssub.s32 %s23, %s35
      %s170 = ssub.s32 %s24, %s31
      %s171 = sor.u32 %s169, %s170
      %p172 = scmp.eq.s32.totalorder %s171, 0
      %s174 = sadd.s32 %s173, 1
      %s175 = scalar_select %p172, %s173, %s174
      %p178 = pneg %p172
      %p179 = scmp.eq.s32.totalorder %s16, 1
      %p180 = por %p178, %p179
      %p181 = scmp.ne.s32.totalorder %s173, %s176
      %p182 = scmp.eq.s32.totalorder %s16, 0
      %p183 = por %p181, %p182
      %p184 = scmp.ne.s32.totalorder %s173, %s176
      %p185 = scmp.eq.s32.totalorder %s21, 1
      %p186 = por %p184, %p185
      %p187 = scmp.ne.s32.totalorder %s176, %s177
      %p188 = scmp.eq.s32.totalorder %s21, 0
      %p189 = por %p187, %p188
      %p190 = scmp.ne.s32.totalorder %s176, %s177
      %p191 = scmp.eq.s32.totalorder %s22, 1
      %p192 = por %p190, %p191
      %p194 = scmp.ne.s32.totalorder %s177, %s193
      %p195 = scmp.eq.s32.totalorder %s22, 0
      %p196 = por %p194, %p195
      %p197 = scmp.le.s32.totalorder 1, %s16
      %p198 = scmp.lt.s32.totalorder %s16, 3
      %p199 = pnand %p197, %p198
      %p200 = pneg %p199
      // Predicated region
      $region9: #{tpu_custom_call.1} parent=5 // pred_check
        _
      $region10: #{tpu_custom_call.1} parent=5 // pred_check_branch
        %202 = sbr.rel (%p199) target = $region12
      $region11: #{tpu_custom_call.1} parent=5 // pred_region
        %s203 = ssub.s32 %s16, 1
        // Predicated region
        $region13: #{tpu_custom_call.1} parent=11 // pred_check
          %p204 = pneg %p77
        $region14: #{tpu_custom_call.1} parent=11 // pred_check_branch
          %206 = sbr.rel (%p204) target = $region16
        $region15: #{tpu_custom_call.1} parent=11 // pred_region
          %208 = vsyncadd [#allocation5], 0
          %s209 = sshll.u32 %s1, 4
          %s210 = int_to_ptr.hbm [resolvable:$true] %s209
          %s211 = sshll.u32 [#allocation4], 4
          %s212 = int_to_ptr.vmem [resolvable:$true] %s211
          %217 = dma.hbm_to_vmem [thread:$0]  %s210, 2048, %s212, [#allocation5], 256, 256, 16
        $region16: #{tpu_custom_call.1} parent=11 // pred_fallthru
          _
        // Predicated region
        $region17: #{tpu_custom_call.1} parent=11 // pred_check
          %p218 = pneg %p98
        $region18: #{tpu_custom_call.1} parent=11 // pred_check_branch
          %220 = sbr.rel (%p218) target = $region20
        $region19: #{tpu_custom_call.1} parent=11 // pred_region
          _
        $region20: #{tpu_custom_call.1} parent=11 // pred_fallthru
          _
        // Predicated region
        $region21: #{tpu_custom_call.1} parent=11 // pred_check
          %p221 = pneg %p119
        $region22: #{tpu_custom_call.1} parent=11 // pred_check_branch
          %223 = sbr.rel (%p221) target = $region24
        $region23: #{tpu_custom_call.1} parent=11 // pred_region
          _
        $region24: #{tpu_custom_call.1} parent=11 // pred_fallthru
          _
        // Predicated region
        $region25: #{tpu_custom_call.1} parent=11 // pred_check
          %p224 = pneg %p140
        $region26: #{tpu_custom_call.1} parent=11 // pred_check_branch
          %226 = sbr.rel (%p224) target = $region28
        $region27: #{tpu_custom_call.1} parent=11 // pred_region
          _
        $region28: #{tpu_custom_call.1} parent=11 // pred_fallthru
          _
        // Predicated region
        $region29: #{tpu_custom_call.1} parent=11 // pred_check
          %p227 = pneg %p161
        $region30: #{tpu_custom_call.1} parent=11 // pred_check_branch
          %229 = sbr.rel (%p227) target = $region32
        $region31: #{tpu_custom_call.1} parent=11 // pred_region
          _
        $region32: #{tpu_custom_call.1} parent=11 // pred_fallthru
          _
      $region12: #{tpu_custom_call.1} parent=5 // pred_fallthru
        _
      %p230 = scmp.lt.s32.totalorder %s16, 2
      // Predicated region
      $region33: #{tpu_custom_call.1} parent=5 // pred_check
        %p231 = pneg %p230
      $region34: #{tpu_custom_call.1} parent=5 // pred_check_branch
        %233 = sbr.rel (%p231) target = $region36
      $region35: #{tpu_custom_call.1} parent=5 // pred_region
        // Predicated region
        $region37: #{tpu_custom_call.1} parent=35 // pred_check
          %p234 = pneg %p50
        $region38: #{tpu_custom_call.1} parent=35 // pred_check_branch
          %236 = sbr.rel (%p234) target = $region40
        $region39: #{tpu_custom_call.1} parent=35 // pred_region
          %s237 = sand.u32 %s40, 1
          %s238 = scalar_lea.sflag [#allocation3], %s237
          %s239 = sand.u32 %s40, 1
          %s240 = smul.addr %s239, 384
          %s241 = scalar_lea.vmem [#allocation2], %s240
          %s242 = smul.u32 2, %s24
          %244 = vsyncadd %s238, 0
          %s245 = smul.addr %s23, 48
          %s246 = sadd.s32 %s242, %s245
          %s247 = smul.addr %s246, 8
          %s248 = scalar_lea.hbm %s0, %s247
          %s249 = sshll.u32 %s248, 4
          %s250 = int_to_ptr.hbm [resolvable:$true] %s249
          %s251 = sshll.u32 %s241, 4
          %s252 = int_to_ptr.vmem [resolvable:$true] %s251
          %257 = dma.hbm_to_vmem [thread:$0]  %s250, 6144, %s252, %s238, 256, 256, 16
        $region40: #{tpu_custom_call.1} parent=35 // pred_fallthru
          _
      $region36: #{tpu_custom_call.1} parent=5 // pred_fallthru
        _
      %p258 = scmp.le.s32.totalorder 1, %s16
      %p259 = scmp.lt.s32.totalorder %s16, 3
      %p260 = pnand %p258, %p259
      %p261 = pneg %p260
      // Predicated region
      $region41: #{tpu_custom_call.1} parent=5 // pred_check
        _
      $region42: #{tpu_custom_call.1} parent=5 // pred_check_branch
        %263 = sbr.rel (%p260) target = $region44
      $region43: #{tpu_custom_call.1} parent=5 // pred_region
        %s264 = ssub.s32 %s16, 1
        %s265 = sand.u32 %s43, 1
        %s266 = scalar_lea.sflag [#allocation3], %s265
        %s267 = sand.u32 %s43, 1
        %s268 = smul.addr %s267, 384
        %s269 = scalar_lea.vmem [#allocation2], %s268
        // Predicated region
        $region45: #{tpu_custom_call.1} parent=43 // pred_check
          %p270 = pneg %p56
        $region46: #{tpu_custom_call.1} parent=43 // pred_check_branch
          %272 = sbr.rel (%p270) target = $region48
        $region47: #{tpu_custom_call.1} parent=43 // pred_region
          %274 = dma.done %s266, 6144
        $region48: #{tpu_custom_call.1} parent=43 // pred_fallthru
          _
        // Predicated region
        $region49: #{tpu_custom_call.1} parent=43 // pred_check
          %p275 = pneg %p77
        $region50: #{tpu_custom_call.1} parent=43 // pred_check_branch
          %277 = sbr.rel (%p275) target = $region52
        $region51: #{tpu_custom_call.1} parent=43 // pred_region
          %279 = dma.done [#allocation5], 2048
        $region52: #{tpu_custom_call.1} parent=43 // pred_fallthru
          _
        %s280 = sand.u32 %s43, 1
        %s281 = scalar_lea.sflag [#allocation3], %s280
        %s282 = sand.u32 %s43, 1
        %s283 = smul.addr %s282, 384
        %s284 = scalar_lea.vmem [#allocation2], %s283
        %p285 = pneg %p56
        %p286 = pneg %p53
        %p287 = pneg %p77
        %p288 = pneg %p74
        %p289 = pneg %p98
        %p290 = pneg %p95
        %p291 = pneg %p119
        %p292 = pneg %p116
        %p293 = pneg %p140
        %p294 = pneg %p137
        %p295 = pneg %p161
        %p296 = pneg %p158
        %p297 = pneg %p189
        %p298 = pneg %p186
        %s299 = smul.u32 2, %s26
        %p300 = scmp.lt.s32.totalorder %s25, 1
        %s301 = scalar_select %p300, %s25, 1
        %p302 = scmp.lt.s32.totalorder %s299, 1
        %s303 = scalar_select %p302, %s299, 1
        %s304 = smul.addr %s301, 2
        %s305 = sadd.s32 %s303, %s304
        %s306 = smul.addr %s305, 4
        %s307 = scalar_lea.vmem %s6, %s306
        %s308 = smul.u32 2, %s26
        %s309 = smul.u32 2, %s26
        %p310 = scmp.lt.s32.totalorder %s25, 1
        %s311 = scalar_select %p310, %s25, 1
        %p312 = scmp.lt.s32.totalorder %s309, 1
        %s313 = scalar_select %p312, %s309, 1
        %s314 = smul.addr %s311, 2
        %s315 = sadd.s32 %s313, %s314
        %s316 = smul.addr %s315, 4
        %s317 = scalar_lea.vmem %s6, %s316
        %s318 = smul.u32 2, %s26
        %v319 = vld [vmem:[%s269] sm:$0xff]
        %v320 = vld [vmem:[%s269 + $0x8] sm:$0xff]
        %v321 = vld [vmem:[%s269 + $0x10] sm:$0xff]
        %v322 = vld [vmem:[%s269 + $0x18] sm:$0xff]
        %v323 = vld [vmem:[%s269 + $0x20] sm:$0xff]
        %v324 = vld [vmem:[%s269 + $0x28] sm:$0xff]
        %v325 = vld [vmem:[%s269 + $0x30] sm:$0xff]
        %v326 = vld [vmem:[%s269 + $0x38] sm:$0xff]
        %v327 = vld [vmem:[%s269 + $0x40] sm:$0xff]
        %v328 = vld [vmem:[%s269 + $0x48] sm:$0xff]
        %v329 = vld [vmem:[%s269 + $0x50] sm:$0xff]
        %v330 = vld [vmem:[%s269 + $0x58] sm:$0xff]
        %v331 = vld [vmem:[%s269 + $0x60] sm:$0xff]
        %v332 = vld [vmem:[%s269 + $0x68] sm:$0xff]
        %v333 = vld [vmem:[%s269 + $0x70] sm:$0xff]
        %v334 = vld [vmem:[%s269 + $0x78] sm:$0xff]
        %v335 = vld [vmem:[%s269 + $0x80] sm:$0xff]
        %v336 = vld [vmem:[%s269 + $0x88] sm:$0xff]
        %v337 = vld [vmem:[%s269 + $0x90] sm:$0xff]
        %v338 = vld [vmem:[%s269 + $0x98] sm:$0xff]
        %v339 = vld [vmem:[%s269 + $0xa0] sm:$0xff]
        %v340 = vld [vmem:[%s269 + $0xa8] sm:$0xff]
        %v341 = vld [vmem:[%s269 + $0xb0] sm:$0xff]
        %v342 = vld [vmem:[%s269 + $0xb8] sm:$0xff]
        %v343 = vld [vmem:[%s269 + $0xc0] sm:$0xff]
        %v344 = vld [vmem:[%s269 + $0xc8] sm:$0xff]
        %v345 = vld [vmem:[%s269 + $0xd0] sm:$0xff]
        %v346 = vld [vmem:[%s269 + $0xd8] sm:$0xff]
        %v347 = vld [vmem:[%s269 + $0xe0] sm:$0xff]
        %v348 = vld [vmem:[%s269 + $0xe8] sm:$0xff]
        %v349 = vld [vmem:[%s269 + $0xf0] sm:$0xff]
        %v350 = vld [vmem:[%s269 + $0xf8] sm:$0xff]
        %v351 = vld [vmem:[%s269 + $0x100] sm:$0xff]
        %v352 = vld [vmem:[%s269 + $0x108] sm:$0xff]
        %v353 = vld [vmem:[%s269 + $0x110] sm:$0xff]
        %v354 = vld [vmem:[%s269 + $0x118] sm:$0xff]
        %v355 = vld [vmem:[%s269 + $0x120] sm:$0xff]
        %v356 = vld [vmem:[%s269 + $0x128] sm:$0xff]
        %v357 = vld [vmem:[%s269 + $0x130] sm:$0xff]
        %v358 = vld [vmem:[%s269 + $0x138] sm:$0xff]
        %v359 = vld [vmem:[%s269 + $0x140] sm:$0xff]
        %v360 = vld [vmem:[%s269 + $0x148] sm:$0xff]
        %v361 = vld [vmem:[%s269 + $0x150] sm:$0xff]
        %v362 = vld [vmem:[%s269 + $0x158] sm:$0xff]
        %v363 = vld [vmem:[%s269 + $0x160] sm:$0xff]
        %v364 = vld [vmem:[%s269 + $0x168] sm:$0xff]
        %v365 = vld [vmem:[%s269 + $0x170] sm:$0xff]
        %v366 = vld [vmem:[%s269 + $0x178] sm:$0xff]
        %v367 = vld [vmem:[#allocation4] sm:$0xff]
        %v368 = vld [vmem:[#allocation4 + $0x8] sm:$0xff]
        %v369 = vld [vmem:[#allocation4 + $0x10] sm:$0xff]
        %v370 = vld [vmem:[#allocation4 + $0x18] sm:$0xff]
        %v371 = vld [vmem:[#allocation4 + $0x20] sm:$0xff]
        %v372 = vld [vmem:[#allocation4 + $0x28] sm:$0xff]
        %v373 = vld [vmem:[#allocation4 + $0x30] sm:$0xff]
        %v374 = vld [vmem:[#allocation4 + $0x38] sm:$0xff]
        %v375 = vld [vmem:[#allocation4 + $0x40] sm:$0xff]
        %v376 = vld [vmem:[#allocation4 + $0x48] sm:$0xff]
        %v377 = vld [vmem:[#allocation4 + $0x50] sm:$0xff]
        %v378 = vld [vmem:[#allocation4 + $0x58] sm:$0xff]
        %v379 = vld [vmem:[#allocation4 + $0x60] sm:$0xff]
        %v380 = vld [vmem:[#allocation4 + $0x68] sm:$0xff]
        %v381 = vld [vmem:[#allocation4 + $0x70] sm:$0xff]
        %v382 = vld [vmem:[#allocation4 + $0x78] sm:$0xff]
        %v383 = vld [vmem:[%s2] sm:$0xff]
        %v384 = vld [vmem:[%s2 + $0x8] sm:$0xff]
        %v385 = vld [vmem:[%s2 + $0x10] sm:$0xff]
        %v386 = vld [vmem:[%s2 + $0x18] sm:$0xff]
        %v387 = vld [vmem:[%s2 + $0x20] sm:$0xff]
        %v388 = vld [vmem:[%s2 + $0x28] sm:$0xff]
        %v389 = vld [vmem:[%s2 + $0x30] sm:$0xff]
        %v390 = vld [vmem:[%s2 + $0x38] sm:$0xff]
        %392 = vset.pattern.permute.xlu0 0
        %393 = vperm.xlu0 %392, %v383
        %v394 = vpop.permute.xlu0 %393
        %397 = vset.pattern.permute.xlu0 0
        %398 = vperm.xlu0 %397, %v384
        %v399 = vpop.permute.xlu0 %398
        %402 = vset.pattern.permute.xlu0 0
        %403 = vperm.xlu0 %402, %v385
        %v404 = vpop.permute.xlu0 %403
        %407 = vset.pattern.permute.xlu0 0
        %408 = vperm.xlu0 %407, %v386
        %v409 = vpop.permute.xlu0 %408
        %412 = vset.pattern.permute.xlu0 0
        %413 = vperm.xlu0 %412, %v387
        %v414 = vpop.permute.xlu0 %413
        %417 = vset.pattern.permute.xlu0 0
        %418 = vperm.xlu0 %417, %v388
        %v419 = vpop.permute.xlu0 %418
        %422 = vset.pattern.permute.xlu0 0
        %423 = vperm.xlu0 %422, %v389
        %v424 = vpop.permute.xlu0 %423
        %427 = vset.pattern.permute.xlu0 0
        %428 = vperm.xlu0 %427, %v390
        %v429 = vpop.permute.xlu0 %428
        %vm431 = vcmask 523264
        %v433 = vsel %vm431, %v368, 0
        %v436 = vsel %vm431, %v370, 0
        %v439 = vsel %vm431, %v372, 0
        %v442 = vsel %vm431, %v374, 0
        %v445 = vsel %vm431, %v376, 0
        %v448 = vsel %vm431, %v378, 0
        %v451 = vsel %vm431, %v380, 0
        %v454 = vsel %vm431, %v382, 0
        %456 = vmatpush.msra.mxu0 %v349
        %457 = vmatpush.msra.mxu0 %v347
        %458 = vmatpush.msra.mxu0 %v345
        %459 = vmatpush.msra.mxu0 %v343
        %460 = vmatpush.msra.mxu0 %v341
        %461 = vmatpush.msra.mxu0 %v339
        %462 = vmatpush.msra.mxu0 %v337
        %463 = vmatpush.msra.mxu0 %v335
        %464 = vmatpush.msra.mxu0 %v333
        %465 = vmatpush.msra.mxu0 %v331
        %466 = vmatpush.msra.mxu0 %v329
        %467 = vmatpush.msra.mxu0 %v327
        %468 = vmatpush.msra.mxu0 %v325
        %469 = vmatpush.msra.mxu0 %v323
        %470 = vmatpush.msra.mxu0 %v321
        %471 = vmatpush.msra.mxu0 %v319
        %472 = vmatmul.f32.gmra.mxu0 %v367
        %v473 = vpop.f32.mrf.mxu0
        %v474 = vadd.f32 %v394, %v473
        %475 = vmatmul.f32.gmra.mxu0 %v369
        %v476 = vpop.f32.mrf.mxu0
        %v477 = vadd.f32 %v399, %v476
        %478 = vmatmul.f32.gmra.mxu0 %v371
        %v479 = vpop.f32.mrf.mxu0
        %v480 = vadd.f32 %v404, %v479
        %481 = vmatmul.f32.gmra.mxu0 %v373
        %v482 = vpop.f32.mrf.mxu0
        %v483 = vadd.f32 %v409, %v482
        %484 = vmatmul.f32.gmra.mxu0 %v375
        %v485 = vpop.f32.mrf.mxu0
        %v486 = vadd.f32 %v414, %v485
        %487 = vmatmul.f32.gmra.mxu0 %v377
        %v488 = vpop.f32.mrf.mxu0
        %v489 = vadd.f32 %v419, %v488
        %490 = vmatmul.f32.gmra.mxu0 %v379
        %v491 = vpop.f32.mrf.mxu0
        %v492 = vadd.f32 %v424, %v491
        %493 = vmatmul.f32.gmra.mxu0 %v381
        %v494 = vpop.f32.mrf.mxu0
        %v495 = vadd.f32 %v429, %v494
        %496 = vdwg.mxu0
        %497 = vmatpush.msra.mxu0 0.0
        %498 = vmatpush.msra.mxu0 0.0
        %499 = vmatpush.msra.mxu0 0.0
        %500 = vmatpush.msra.mxu0 0.0
        %501 = vmatpush.msra.mxu0 0.0
        %502 = vmatpush.msra.mxu0 0.0
        %503 = vmatpush.msra.mxu0 0.0
        %504 = vmatpush.msra.mxu0 0.0
        %505 = vmatpush.msra.mxu0 %v365
        %506 = vmatpush.msra.mxu0 %v363
        %507 = vmatpush.msra.mxu0 %v361
        %508 = vmatpush.msra.mxu0 %v359
        %509 = vmatpush.msra.mxu0 %v357
        %510 = vmatpush.msra.mxu0 %v355
        %511 = vmatpush.msra.mxu0 %v353
        %512 = vmatpush.msra.mxu0 %v351
        %513 = vmatmul.f32.gmra.mxu0 %v433
        %v514 = vpop.f32.mrf.mxu0
        %v515 = vadd.f32 %v474, %v514
        %516 = vmatmul.f32.gmra.mxu0 %v436
        %v517 = vpop.f32.mrf.mxu0
        %v518 = vadd.f32 %v477, %v517
        %519 = vmatmul.f32.gmra.mxu0 %v439
        %v520 = vpop.f32.mrf.mxu0
        %v521 = vadd.f32 %v480, %v520
        %522 = vmatmul.f32.gmra.mxu0 %v442
        %v523 = vpop.f32.mrf.mxu0
        %v524 = vadd.f32 %v483, %v523
        %525 = vmatmul.f32.gmra.mxu0 %v445
        %v526 = vpop.f32.mrf.mxu0
        %v527 = vadd.f32 %v486, %v526
        %528 = vmatmul.f32.gmra.mxu0 %v448
        %v529 = vpop.f32.mrf.mxu0
        %v530 = vadd.f32 %v489, %v529
        %531 = vmatmul.f32.gmra.mxu0 %v451
        %v532 = vpop.f32.mrf.mxu0
        %v533 = vadd.f32 %v492, %v532
        %534 = vmatmul.f32.gmra.mxu0 %v454
        %v535 = vpop.f32.mrf.mxu0
        %v536 = vadd.f32 %v495, %v535
        %537 = vdwg.mxu0
        %538 = vmatpush.msra.mxu0 %v350
        %539 = vmatpush.msra.mxu0 %v348
        %540 = vmatpush.msra.mxu0 %v346
        %541 = vmatpush.msra.mxu0 %v344
        %542 = vmatpush.msra.mxu0 %v342
        %543 = vmatpush.msra.mxu0 %v340
        %544 = vmatpush.msra.mxu0 %v338
        %545 = vmatpush.msra.mxu0 %v336
        %546 = vmatpush.msra.mxu0 %v334
        %547 = vmatpush.msra.mxu0 %v332
        %548 = vmatpush.msra.mxu0 %v330
        %549 = vmatpush.msra.mxu0 %v328
        %550 = vmatpush.msra.mxu0 %v326
        %551 = vmatpush.msra.mxu0 %v324
        %552 = vmatpush.msra.mxu0 %v322
        %553 = vmatpush.msra.mxu0 %v320
        %554 = vmatmul.f32.gmra.mxu0 %v367
        %v555 = vpop.f32.mrf.mxu0
        %v556 = vadd.f32 %v394, %v555
        %557 = vmatmul.f32.gmra.mxu0 %v369
        %v558 = vpop.f32.mrf.mxu0
        %v559 = vadd.f32 %v399, %v558
        %560 = vmatmul.f32.gmra.mxu0 %v371
        %v561 = vpop.f32.mrf.mxu0
        %v562 = vadd.f32 %v404, %v561
        %563 = vmatmul.f32.gmra.mxu0 %v373
        %v564 = vpop.f32.mrf.mxu0
        %v565 = vadd.f32 %v409, %v564
        %566 = vmatmul.f32.gmra.mxu0 %v375
        %v567 = vpop.f32.mrf.mxu0
        %v568 = vadd.f32 %v414, %v567
        %569 = vmatmul.f32.gmra.mxu0 %v377
        %v570 = vpop.f32.mrf.mxu0
        %v571 = vadd.f32 %v419, %v570
        %572 = vmatmul.f32.gmra.mxu0 %v379
        %v573 = vpop.f32.mrf.mxu0
        %v574 = vadd.f32 %v424, %v573
        %575 = vmatmul.f32.gmra.mxu0 %v381
        %v576 = vpop.f32.mrf.mxu0
        %v577 = vadd.f32 %v429, %v576
        %578 = vdwg.mxu0
        %579 = vmatpush.msra.mxu0 0.0
        %580 = vmatpush.msra.mxu0 0.0
        %581 = vmatpush.msra.mxu0 0.0
        %582 = vmatpush.msra.mxu0 0.0
        %583 = vmatpush.msra.mxu0 0.0
        %584 = vmatpush.msra.mxu0 0.0
        %585 = vmatpush.msra.mxu0 0.0
        %586 = vmatpush.msra.mxu0 0.0
        %587 = vmatpush.msra.mxu0 %v366
        %588 = vmatpush.msra.mxu0 %v364
        %589 = vmatpush.msra.mxu0 %v362
        %590 = vmatpush.msra.mxu0 %v360
        %591 = vmatpush.msra.mxu0 %v358
        %592 = vmatpush.msra.mxu0 %v356
        %593 = vmatpush.msra.mxu0 %v354
        %594 = vmatpush.msra.mxu0 %v352
        %595 = vmatmul.f32.gmra.mxu0 %v433
        %v596 = vpop.f32.mrf.mxu0
        %v597 = vadd.f32 %v556, %v596
        %598 = vmatmul.f32.gmra.mxu0 %v436
        %v599 = vpop.f32.mrf.mxu0
        %v600 = vadd.f32 %v559, %v599
        %601 = vmatmul.f32.gmra.mxu0 %v439
        %v602 = vpop.f32.mrf.mxu0
        %v603 = vadd.f32 %v562, %v602
        %604 = vmatmul.f32.gmra.mxu0 %v442
        %v605 = vpop.f32.mrf.mxu0
        %v606 = vadd.f32 %v565, %v605
        %607 = vmatmul.f32.gmra.mxu0 %v445
        %v608 = vpop.f32.mrf.mxu0
        %v609 = vadd.f32 %v568, %v608
        %610 = vmatmul.f32.gmra.mxu0 %v448
        %v611 = vpop.f32.mrf.mxu0
        %v612 = vadd.f32 %v571, %v611
        %613 = vmatmul.f32.gmra.mxu0 %v451
        %v614 = vpop.f32.mrf.mxu0
        %v615 = vadd.f32 %v574, %v614
        %616 = vmatmul.f32.gmra.mxu0 %v454
        %v617 = vpop.f32.mrf.mxu0
        %v618 = vadd.f32 %v577, %v617
        %619 = vdwg.mxu0
        %vm620 = vcmp.ge.f32.partialorder %v515, 0.0
        %vm621 = vcmp.ge.f32.partialorder %v597, 0.0
        %vm622 = vcmp.ge.f32.partialorder %v518, 0.0
        %vm623 = vcmp.ge.f32.partialorder %v600, 0.0
        %vm624 = vcmp.ge.f32.partialorder %v521, 0.0
        %vm625 = vcmp.ge.f32.partialorder %v603, 0.0
        %vm626 = vcmp.ge.f32.partialorder %v524, 0.0
        %vm627 = vcmp.ge.f32.partialorder %v606, 0.0
        %vm628 = vcmp.ge.f32.partialorder %v527, 0.0
        %vm629 = vcmp.ge.f32.partialorder %v609, 0.0
        %vm630 = vcmp.ge.f32.partialorder %v530, 0.0
        %vm631 = vcmp.ge.f32.partialorder %v612, 0.0
        %vm632 = vcmp.ge.f32.partialorder %v533, 0.0
        %vm633 = vcmp.ge.f32.partialorder %v615, 0.0
        %vm634 = vcmp.ge.f32.partialorder %v536, 0.0
        %vm635 = vcmp.ge.f32.partialorder %v618, 0.0
        %v636 = vmul.f32 %v515, 0.2
        %v637 = vmul.f32 %v597, 0.2
        %v638 = vmul.f32 %v518, 0.2
        %v639 = vmul.f32 %v600, 0.2
        %v640 = vmul.f32 %v521, 0.2
        %v641 = vmul.f32 %v603, 0.2
        %v642 = vmul.f32 %v524, 0.2
        %v643 = vmul.f32 %v606, 0.2
        %v644 = vmul.f32 %v527, 0.2
        %v645 = vmul.f32 %v609, 0.2
        %v646 = vmul.f32 %v530, 0.2
        %v647 = vmul.f32 %v612, 0.2
        %v648 = vmul.f32 %v533, 0.2
        %v649 = vmul.f32 %v615, 0.2
        %v650 = vmul.f32 %v536, 0.2
        %v651 = vmul.f32 %v618, 0.2
        %v652 = vsel %vm620, %v515, %v636
        %v653 = vsel %vm621, %v597, %v637
        %v654 = vsel %vm622, %v518, %v638
        %v655 = vsel %vm623, %v600, %v639
        %v656 = vsel %vm624, %v521, %v640
        %v657 = vsel %vm625, %v603, %v641
        %v658 = vsel %vm626, %v524, %v642
        %v659 = vsel %vm627, %v606, %v643
        %v660 = vsel %vm628, %v527, %v644
        %v661 = vsel %vm629, %v609, %v645
        %v662 = vsel %vm630, %v530, %v646
        %v663 = vsel %vm631, %v612, %v647
        %v664 = vsel %vm632, %v533, %v648
        %v665 = vsel %vm633, %v615, %v649
        %v666 = vsel %vm634, %v536, %v650
        %v667 = vsel %vm635, %v618, %v651
        %v668 = vld [vmem:[%s3] sm:$0xff]
        %v669 = vld [vmem:[%s3 + $0x8] sm:$0xff]
        %v670 = vld [vmem:[%s3 + $0x10] sm:$0xff]
        %v671 = vld [vmem:[%s3 + $0x18] sm:$0xff]
        %v672 = vld [vmem:[%s4] sm:$0xff]
        %v673 = vld [vmem:[%s4 + $0x8] sm:$0xff]
        %v674 = vld [vmem:[%s4 + $0x10] sm:$0xff]
        %v675 = vld [vmem:[%s4 + $0x18] sm:$0xff]
        %677 = vset.pattern.permute.xlu0 0
        %678 = vperm.xlu0 %677, %v672
        %v679 = vpop.permute.xlu0 %678
        %682 = vset.pattern.permute.xlu0 0
        %683 = vperm.xlu0 %682, %v673
        %v684 = vpop.permute.xlu0 %683
        %687 = vset.pattern.permute.xlu0 0
        %688 = vperm.xlu0 %687, %v674
        %v689 = vpop.permute.xlu0 %688
        %692 = vset.pattern.permute.xlu0 0
        %693 = vperm.xlu0 %692, %v675
        %v694 = vpop.permute.xlu0 %693
        %v697 = vsel %vm431, %v668, 0
        %v700 = vsel %vm431, %v669, 0
        %v703 = vsel %vm431, %v670, 0
        %v706 = vsel %vm431, %v671, 0
        %708 = vmatpush.msra.mxu0 0.0
        %709 = vmatpush.msra.mxu0 0.0
        %710 = vmatpush.msra.mxu0 0.0
        %711 = vmatpush.msra.mxu0 0.0
        %712 = vmatpush.msra.mxu0 0.0
        %713 = vmatpush.msra.mxu0 0.0
        %714 = vmatpush.msra.mxu0 0.0
        %715 = vmatpush.msra.mxu0 0.0
        %716 = vmatpush.msra.mxu0 %v666
        %717 = vmatpush.msra.mxu0 %v664
        %718 = vmatpush.msra.mxu0 %v662
        %719 = vmatpush.msra.mxu0 %v660
        %720 = vmatpush.msra.mxu0 %v658
        %721 = vmatpush.msra.mxu0 %v656
        %722 = vmatpush.msra.mxu0 %v654
        %723 = vmatpush.msra.mxu0 %v652
        %724 = vmatmul.f32.gmra.mxu0 %v697
        %v725 = vpop.f32.mrf.mxu0
        %v726 = vadd.f32 %v679, %v725
        %727 = vmatmul.f32.gmra.mxu0 %v700
        %v728 = vpop.f32.mrf.mxu0
        %v729 = vadd.f32 %v684, %v728
        %730 = vmatmul.f32.gmra.mxu0 %v703
        %v731 = vpop.f32.mrf.mxu0
        %v732 = vadd.f32 %v689, %v731
        %733 = vmatmul.f32.gmra.mxu0 %v706
        %v734 = vpop.f32.mrf.mxu0
        %v735 = vadd.f32 %v694, %v734
        %736 = vdwg.mxu0
        %737 = vmatpush.msra.mxu0 0.0
        %738 = vmatpush.msra.mxu0 0.0
        %739 = vmatpush.msra.mxu0 0.0
        %740 = vmatpush.msra.mxu0 0.0
        %741 = vmatpush.msra.mxu0 0.0
        %742 = vmatpush.msra.mxu0 0.0
        %743 = vmatpush.msra.mxu0 0.0
        %744 = vmatpush.msra.mxu0 0.0
        %745 = vmatpush.msra.mxu0 %v667
        %746 = vmatpush.msra.mxu0 %v665
        %747 = vmatpush.msra.mxu0 %v663
        %748 = vmatpush.msra.mxu0 %v661
        %749 = vmatpush.msra.mxu0 %v659
        %750 = vmatpush.msra.mxu0 %v657
        %751 = vmatpush.msra.mxu0 %v655
        %752 = vmatpush.msra.mxu0 %v653
        %753 = vmatmul.f32.gmra.mxu0 %v697
        %v754 = vpop.f32.mrf.mxu0
        %v755 = vadd.f32 %v679, %v754
        %756 = vmatmul.f32.gmra.mxu0 %v700
        %v757 = vpop.f32.mrf.mxu0
        %v758 = vadd.f32 %v684, %v757
        %759 = vmatmul.f32.gmra.mxu0 %v703
        %v760 = vpop.f32.mrf.mxu0
        %v761 = vadd.f32 %v689, %v760
        %762 = vmatmul.f32.gmra.mxu0 %v706
        %v763 = vpop.f32.mrf.mxu0
        %v764 = vadd.f32 %v694, %v763
        %765 = vdwg.mxu0
        %vm766 = vcmp.ge.f32.partialorder %v726, 0.0
        %vm767 = vcmp.ge.f32.partialorder %v755, 0.0
        %vm768 = vcmp.ge.f32.partialorder %v729, 0.0
        %vm769 = vcmp.ge.f32.partialorder %v758, 0.0
        %vm770 = vcmp.ge.f32.partialorder %v732, 0.0
        %vm771 = vcmp.ge.f32.partialorder %v761, 0.0
        %vm772 = vcmp.ge.f32.partialorder %v735, 0.0
        %vm773 = vcmp.ge.f32.partialorder %v764, 0.0
        %v774 = vmul.f32 %v726, 0.2
        %v775 = vmul.f32 %v755, 0.2
        %v776 = vmul.f32 %v729, 0.2
        %v777 = vmul.f32 %v758, 0.2
        %v778 = vmul.f32 %v732, 0.2
        %v779 = vmul.f32 %v761, 0.2
        %v780 = vmul.f32 %v735, 0.2
        %v781 = vmul.f32 %v764, 0.2
        %v782 = vsel %vm766, %v726, %v774
        %v783 = vsel %vm767, %v755, %v775
        %v784 = vsel %vm768, %v729, %v776
        %v785 = vsel %vm769, %v758, %v777
        %v786 = vsel %vm770, %v732, %v778
        %v787 = vsel %vm771, %v761, %v779
        %v788 = vsel %vm772, %v735, %v780
        %v789 = vsel %vm773, %v764, %v781
        %v790 = vld [vmem:[%s5] sm:$0x7]
        %vm791 = vcmask 261120
        %v793 = vsel %vm791, %v790, 0
        %795 = vmatpush.msra.mxu0 0.0
        %796 = vmatpush.msra.mxu0 0.0
        %797 = vmatpush.msra.mxu0 0.0
        %798 = vmatpush.msra.mxu0 0.0
        %799 = vmatpush.msra.mxu0 0.0
        %800 = vmatpush.msra.mxu0 0.0
        %801 = vmatpush.msra.mxu0 0.0
        %802 = vmatpush.msra.mxu0 0.0
        %803 = vmatpush.msra.mxu0 0.0
        %804 = vmatpush.msra.mxu0 0.0
        %805 = vmatpush.msra.mxu0 0.0
        %806 = vmatpush.msra.mxu0 0.0
        %807 = vmatpush.msra.mxu0 %v788
        %808 = vmatpush.msra.mxu0 %v786
        %809 = vmatpush.msra.mxu0 %v784
        %810 = vmatpush.msra.mxu0 %v782
        %811 = vmatmul.f32.gmra.mxu0 %v793
        %v812 = vpop.f32.mrf.mxu0
        %v813 = vadd.f32 0.0, %v812
        %814 = vdwg.mxu0
        %815 = vmatpush.msra.mxu0 0.0
        %816 = vmatpush.msra.mxu0 0.0
        %817 = vmatpush.msra.mxu0 0.0
        %818 = vmatpush.msra.mxu0 0.0
        %819 = vmatpush.msra.mxu0 0.0
        %820 = vmatpush.msra.mxu0 0.0
        %821 = vmatpush.msra.mxu0 0.0
        %822 = vmatpush.msra.mxu0 0.0
        %823 = vmatpush.msra.mxu0 0.0
        %824 = vmatpush.msra.mxu0 0.0
        %825 = vmatpush.msra.mxu0 0.0
        %826 = vmatpush.msra.mxu0 0.0
        %827 = vmatpush.msra.mxu0 %v789
        %828 = vmatpush.msra.mxu0 %v787
        %829 = vmatpush.msra.mxu0 %v785
        %830 = vmatpush.msra.mxu0 %v783
        %831 = vmatmul.f32.gmra.mxu0 %v793
        %v832 = vpop.f32.mrf.mxu0
        %v833 = vadd.f32 0.0, %v832
        %834 = vdwg.mxu0
        %v837 = vrot.slane %v813, 1
        %v838 = vrot.slane %v833, 1
        %v841 = vmax.f32 %v813, %v837
        %v842 = vmax.f32 %v833, %v838
        %v843 = vrot.slane %v813, 2
        %v844 = vrot.slane %v833, 2
        %v847 = vmax.f32 %v841, %v843
        %v848 = vmax.f32 %v842, %v844
        %v849 = vsub.f32 %v813, %v847
        %v850 = vsub.f32 %v833, %v848
        %v851 = vmul.f32 %v849, 1.442695
        %v852 = vpow.pop %v851
        %v853 = vmul.f32 %v850, 1.442695
        %v854 = vpow.pop %v853
        %v857 = vrot.slane %v847, 7
        %v858 = vrot.slane %v848, 7
        %v861 = vsub.f32 %v813, %v857
        %v862 = vsub.f32 %v833, %v858
        %v863 = vmul.f32 %v861, 1.442695
        %v864 = vpow.pop %v863
        %v865 = vmul.f32 %v862, 1.442695
        %v866 = vpow.pop %v865
        %v867 = vrot.slane %v847, 6
        %v868 = vrot.slane %v848, 6
        %v871 = vsub.f32 %v813, %v867
        %v872 = vsub.f32 %v833, %v868
        %v873 = vmul.f32 %v871, 1.442695
        %v874 = vpow.pop %v873
        %v875 = vmul.f32 %v872, 1.442695
        %v876 = vpow.pop %v875
        %v879 = vrot.slane %v864, 1
        %v880 = vrot.slane %v866, 1
        %v883 = vadd.f32 %v852, %v879
        %v884 = vadd.f32 %v854, %v880
        %v887 = vrot.slane %v874, 2
        %v888 = vrot.slane %v876, 2
        %v891 = vadd.f32 %v883, %v887
        %v892 = vadd.f32 %v884, %v888
        %v893 = vrcp.pop %v891
        %v894 = vmul.f32 %v891, %v893
        %v895 = vsub.f32 1.0, %v894
        %v896 = vmul.f32 %v893, %v895
        %v897 = vadd.f32 %v893, %v896
        %vm898 = vweird.f32 %v891
        %vm899 = vweird.f32 %v893
        %vm900 = vmor %vm898, %vm899
        %v901 = vsel %vm900, %v893, %v897
        %v902 = vand.u32 2147483647, %v891
        %vm903 = vcmp.eq.f32.partialorder %v902, 8.507059e+37
        %v904 = vand.u32 %v891, 2147483648
        %v905 = vor.u32 1.1754944e-38, %v904
        %v906 = vsel %vm903, %v905, %v901
        %v907 = vrcp.pop %v892
        %v908 = vmul.f32 %v892, %v907
        %v909 = vsub.f32 1.0, %v908
        %v910 = vmul.f32 %v907, %v909
        %v911 = vadd.f32 %v907, %v910
        %vm912 = vweird.f32 %v892
        %vm913 = vweird.f32 %v907
        %vm914 = vmor %vm912, %vm913
        %v915 = vsel %vm914, %v907, %v911
        %v916 = vand.u32 2147483647, %v892
        %vm917 = vcmp.eq.f32.partialorder %v916, 8.507059e+37
        %v918 = vand.u32 %v892, 2147483648
        %v919 = vor.u32 1.1754944e-38, %v918
        %v920 = vsel %vm917, %v919, %v915
        %v921 = vmul.f32 %v852, %v906
        %v922 = vmul.f32 %v854, %v920
        %v925 = vrot.slane %v906, 7
        %v926 = vrot.slane %v920, 7
        %v929 = vmul.f32 %v864, %v925
        %v930 = vmul.f32 %v866, %v926
        %v931 = vrot.slane %v906, 6
        %v932 = vrot.slane %v920, 6
        %v935 = vmul.f32 %v874, %v931
        %v936 = vmul.f32 %v876, %v932
        %vm937 = vcmask 1040384
        %v938 = vsel %vm937, %v921, %v929
        %v939 = vsel %vm937, %v922, %v930
        %vm940 = vcmask 1041408
        %v941 = vsel %vm940, %v938, %v935
        %v942 = vsel %vm940, %v939, %v936
        %v945 = vrot.slane %v942, 4
        %vm946 = vcmask 1043456
        %v947 = vsel %vm946, %v941, %v945
        %949 = vst [vmem:[%s317] sm:$0x77] %v947
        %s950 = smul.u32 2, %s26
        %p951 = scmp.lt.s32.totalorder %s25, 1
        %s952 = scalar_select %p951, %s25, 1
        %p953 = scmp.lt.s32.totalorder %s950, 1
        %s954 = scalar_select %p953, %s950, 1
        %s955 = smul.addr %s952, 2
        %s956 = sadd.s32 %s954, %s955
        %s957 = smul.addr %s956, 4
        %s958 = scalar_lea.vmem %s6, %s957
        // Predicated region
        $region53: #{tpu_custom_call.1} parent=43 // pred_check
          %p959 = pneg %p186
        $region54: #{tpu_custom_call.1} parent=43 // pred_check_branch
          %961 = sbr.rel (%p959) target = $region56
        $region55: #{tpu_custom_call.1} parent=43 // pred_region
          %s962 = smul.u32 2, %s26
        $region56: #{tpu_custom_call.1} parent=43 // pred_fallthru
          _
      $region44: #{tpu_custom_call.1} parent=5 // pred_fallthru
        _
      %p963 = scmp.le.s32.totalorder 2, %s16
      // Predicated region
      $region57: #{tpu_custom_call.1} parent=5 // pred_check
        %p964 = pneg %p963
      $region58: #{tpu_custom_call.1} parent=5 // pred_check_branch
        %966 = sbr.rel (%p964) target = $region60
      $region59: #{tpu_custom_call.1} parent=5 // pred_region
        %s967 = ssub.s32 %s16, 2
        // Predicated region
        $region61: #{tpu_custom_call.1} parent=59 // pred_check
          %p968 = pneg %p192
        $region62: #{tpu_custom_call.1} parent=59 // pred_check_branch
          %970 = sbr.rel (%p968) target = $region64
        $region63: #{tpu_custom_call.1} parent=59 // pred_region
          %s971 = smul.u32 2, %s28
          %p972 = scmp.lt.s32.totalorder %s27, 1
          %s973 = scalar_select %p972, %s27, 1
          %p974 = scmp.lt.s32.totalorder %s971, 1
          %s975 = scalar_select %p974, %s971, 1
          %s976 = smul.addr %s973, 2
          %s977 = sadd.s32 %s975, %s976
          %s978 = smul.addr %s977, 4
          %s979 = scalar_lea.vmem %s6, %s978
        $region64: #{tpu_custom_call.1} parent=59 // pred_fallthru
          _
      $region60: #{tpu_custom_call.1} parent=5 // pred_fallthru
        _
    $region6: #{tpu_custom_call.1} parent=1 // loop_footer
      %s20 = sadd.s32 1, %s16
    $region7: #{tpu_custom_call.1} parent=1 // loop_footer_branch
      %15 = sbr.rel target = $region3
    $region8: #{tpu_custom_call.1} parent=1 // loop_exit
      _
    %980 = vsyncpa [#allocation3], 1
    %s981 = scalar_lea.sflag [#allocation3], 1
    %982 = vsyncpa %s981, 1
    %983 = vsyncpa [#allocation5], 1

</llo_original>
